<compile_context>
chip_gen: v7x
topology: tpu7x:2x2x1
jax: 0.10.0
libtpu: 0.0.40
codegen_flags: <defaults>
</compile_context>

<pallas_src>
import jax
import jax.numpy as jnp
from jax.experimental import pallas as pl
from jax.experimental.pallas import tpu as pltpu


def _pos_add_kernel(x_ref, pe_ref, o_ref):
    # x_ref / o_ref: (1, tm, lanes) tile for one batch element; pe_ref: (tm, lanes) tile.
    o_ref[0, :, :] = x_ref[0, :, :] + pe_ref[...]


def positional_encoding_forward(x, pe, *, tile_rows=1024):
    """x: (B, S, E), pe: (S, E) -> (B, S, E) computed as x + pe (broadcast over batch)."""
    B, S, E = x.shape
    assert pe.shape == (S, E)
    dsize = jnp.dtype(x.dtype).itemsize

    # --- Lane-dense view: make the last dim 128 when the (S, E) row block is contiguous. ---
    if (S * E) % 128 == 0:
        lanes = 128
        rows = (S * E) // 128               # 30 for S=60, E=64
        x_v = x.reshape(B, rows, lanes)     # contiguous reshape: free
        pe_v = pe.reshape(rows, lanes)
    else:
        # Fallback: keep original layout; block last dim equals the full array dim,
        # so the (8,128) rule is still satisfied.
        lanes, rows = E, S
        x_v, pe_v = x, pe

    # --- Row tiling: single full-extent tile when small, tile_rows-sized tiles otherwise. ---
    if rows <= tile_rows:
        tm = rows                            # full extent (no divisibility requirement)
    else:
        tm = tile_rows                       # multiple of 8; ragged last tile masked by Pallas
    n_tiles = pl.cdiv(rows, tm)

    # Batch innermost so the pe tile (index_map independent of b) stays resident across it.
    grid = (n_tiles, B)

    cost = pl.CostEstimate(
        flops=B * S * E,
        transcendentals=0,
        bytes_accessed=(2 * B * S * E + S * E) * dsize,
    )

    out_v = pl.pallas_call(
        _pos_add_kernel,
        out_shape=jax.ShapeDtypeStruct((B, rows, lanes), x.dtype),
        grid_spec=pltpu.PrefetchScalarGridSpec(
            num_scalar_prefetch=0,
            grid=grid,
            in_specs=[
                pl.BlockSpec((1, tm, lanes), lambda i, b: (b, i, 0)),  # one batch element, one row tile
                pl.BlockSpec((tm, lanes), lambda i, b: (i, 0)),        # pe: batch-independent row tile
            ],
            out_specs=pl.BlockSpec((1, tm, lanes), lambda i, b: (b, i, 0)),
        ),
        compiler_params=pltpu.CompilerParams(
            dimension_semantics=("parallel", "parallel"),
        ),
        cost_estimate=cost,
    )(x_v, pe_v)

    return out_v.reshape(B, S, E)


if __name__ == "__main__":
    embed_dim = 64
    seq_length = 60
    batch = 2

    key = jax.random.PRNGKey(0)
    kx, kp = jax.random.split(key)

    # Deterministic "parameter" (torch.randn equivalent) and input.
    x = jax.random.normal(kx, (batch, seq_length, embed_dim), dtype=jnp.float32)
    pe_param = jax.random.normal(kp, (seq_length, embed_dim), dtype=jnp.float32)

    out = positional_encoding_forward(x, pe_param)
    out = jax.block_until_ready(out)

    # Correctness check against plain-JAX reference (same broadcast semantics as PyTorch).
    ref = x + pe_param[None, :, :]
    assert out.shape == (batch, seq_length, embed_dim)
    assert jnp.allclose(out, ref, atol=1e-6, rtol=1e-6)

    print("KERNEL_OK")
</pallas_src>

<mosaic_0001>
module attributes {stable_mosaic.version = 11 : i64} {
  func.func @_pos_add_kernel(%arg0: i32, %arg1: i32, %arg2: memref<1x30x128xf32, #tpu.memory_space<vmem>>, %arg3: memref<30x128xf32, #tpu.memory_space<vmem>>, %arg4: memref<1x30x128xf32, #tpu.memory_space<vmem>>) attributes {dimension_semantics = [#tpu.dimension_semantics<parallel>, #tpu.dimension_semantics<parallel>], iteration_bounds = array<i64: 1, 2>, scalar_prefetch = 0 : i64, scratch_operands = 0 : i64, tpu.core_type = #tpu.core_type<tc>, window_params = [{transform_indices = @transform_0, window_bounds = array<i64: 1, 30, 128>}, {transform_indices = @transform_1, window_bounds = array<i64: 30, 128>}, {transform_indices = @transform_2, window_bounds = array<i64: 1, 30, 128>}]} {
    %c0 = arith.constant 0 : index
    %c0_0 = arith.constant 0 : index
    %c0_1 = arith.constant 0 : index
    %0 = vector.load %arg2[%c0, %c0_0, %c0_1] : memref<1x30x128xf32, #tpu.memory_space<vmem>>, vector<1x30x128xf32>
    %1 = vector.shape_cast %0 : vector<1x30x128xf32> to vector<30x128xf32>
    %c0_2 = arith.constant 0 : index
    %c0_3 = arith.constant 0 : index
    %2 = vector.load %arg3[%c0_2, %c0_3] : memref<30x128xf32, #tpu.memory_space<vmem>>, vector<30x128xf32>
    %3 = arith.addf %1, %2 : vector<30x128xf32>
    %c0_4 = arith.constant 0 : index
    %c0_5 = arith.constant 0 : index
    %c0_6 = arith.constant 0 : index
    %4 = vector.load %arg4[%c0_4, %c0_5, %c0_6] : memref<1x30x128xf32, #tpu.memory_space<vmem>>, vector<1x30x128xf32>
    %5 = vector.shape_cast %4 : vector<1x30x128xf32> to vector<30x128xf32>
    %6 = vector.shape_cast %3 : vector<30x128xf32> to vector<1x30x128xf32>
    tpu.vector_store %arg4[%c0_4, %c0_5, %c0_6], %6 {strides = array<i32>} : memref<1x30x128xf32, #tpu.memory_space<vmem>>, vector<1x30x128xf32>,
    return
  }
  func.func @transform_0(%arg0: i32, %arg1: i32) -> (i32, i32, i32) {
    %c0_i32 = arith.constant 0 : i32
    %c0_i32_0 = arith.constant 0 : i32
    return %arg1, %arg0, %c0_i32 : i32, i32, i32
  }
  func.func @transform_1(%arg0: i32, %arg1: i32) -> (i32, i32) {
    %c0_i32 = arith.constant 0 : i32
    %c0_i32_0 = arith.constant 0 : i32
    return %arg0, %c0_i32 : i32, i32
  }
  func.func @transform_2(%arg0: i32, %arg1: i32) -> (i32, i32, i32) {
    %c0_i32 = arith.constant 0 : i32
    %c0_i32_0 = arith.constant 0 : i32
    return %arg1, %arg0, %c0_i32 : i32, i32, i32
  }
}

</mosaic_0001>

<llo_original>
// kernel: tpu_custom_call.1
$region0: #{tpu_custom_call.1}
  #allocation0 [shape = 'u32[]', space=smem, size = 0x4, offset = 0x4, fixed_abs, tag = 'smem constant byte address 0x4 - core index']
  #allocation1 [shape = 'u32[144,128]{1,0:T(1,128)}', space=vmem, size = 0x12000, scoped, tag = 'internal scratch']
  %s0 = inlined_call_operand.vmem [shape: f32[2,30,128], index: 0, kind: input, shape index: {}]
  %s1 = inlined_call_operand.vmem [shape: f32[30,128], index: 1, kind: input, shape index: {}]
  %s2 = inlined_call_operand.vmem [shape: f32[2,30,128], index: 2, kind: output, shape index: {}]
  %s3 = sld [smem:[#allocation0]]
  $region41: #{tpu_custom_call.1} parent=0
    _
  %s5 = ssub.s32 1, %s3
  %s6 = scalar_select 0, %s5, %s3
  loop: start=0, step=1, limit=4
  $region2: #{tpu_custom_call.1} parent=0 // loop_pre_header
    _
  $region3: #{tpu_custom_call.1} parent=0 // loop_header
    %s8 = sphi 0, %s12
    %p9 = scmp.ge.s32.totalorder %s8, 4
    %s15 = sphi 0, %s27
    %s16 = sphi 0, %s23
    %s17 = sphi 0, %s15
    %s18 = sphi 0, %s16
    %s19 = sphi 0, %s17
    %s20 = sphi 0, %s18
    %s32 = sphi 0, %s34
    %s35 = sphi 0, %s32
    %s36 = sphi 0, %s35
    %s52 = sphi 0, %s36
    %s58 = sphi 0, %s60
    %s61 = sphi 0, %s58
    %s62 = sphi 0, %s61
    %s78 = sphi 0, %s62
    %s86 = sphi 0, %s88
    %s89 = sphi 0, %s86
    %s90 = sphi 0, %s89
    %s106 = sphi 0, %s90
  $region4: #{tpu_custom_call.1} parent=0 // loop_header_branch
    %11 = sbr.rel (%p9) target = $region8
  $region5: #{tpu_custom_call.1} parent=0 // loop_body
    %s13 = ssub.s32 %s8, 1
    %s14 = ssub.s32 %s8, 2
    %s21 = sadd.s32 1, %s16
    %p22 = scmp.ge.s32.totalorder %s21, 2
    %s23 = scalar_select %p22, 0, %s21
    %s24 = sadd.s32 1, %s15
    %s25 = scalar_select %p22, %s24, %s15
    %p26 = scmp.ge.s32.totalorder %s25, 1
    %s27 = scalar_select %p26, 0, %s25
    %s28 = ssub.s32 %s16, %s23
    %s29 = ssub.s32 %s15, %s27
    %s30 = sor.u32 %s28, %s29
    %p31 = scmp.eq.s32.totalorder %s30, 0
    %s33 = sadd.s32 %s32, 1
    %s34 = scalar_select %p31, %s32, %s33
    %p37 = pneg %p31
    %p38 = scmp.eq.s32.totalorder %s8, 1
    %p39 = por %p37, %p38
    %p40 = scmp.ne.s32.totalorder %s32, %s35
    %p41 = scmp.eq.s32.totalorder %s8, 0
    %p42 = por %p40, %p41
    %p43 = scmp.ne.s32.totalorder %s32, %s35
    %p44 = scmp.eq.s32.totalorder %s13, 1
    %p45 = por %p43, %p44
    %p46 = scmp.ne.s32.totalorder %s35, %s36
    %p47 = scmp.eq.s32.totalorder %s13, 0
    %p48 = por %p46, %p47
    %p49 = scmp.ne.s32.totalorder %s35, %s36
    %p50 = scmp.eq.s32.totalorder %s14, 1
    %p51 = por %p49, %p50
    %p53 = scmp.ne.s32.totalorder %s36, %s52
    %p54 = scmp.eq.s32.totalorder %s14, 0
    %p55 = por %p53, %p54
    %s56 = ssub.s32 %s15, %s27
    %p57 = scmp.eq.s32.totalorder %s56, 0
    %s59 = sadd.s32 %s58, 1
    %s60 = scalar_select %p57, %s58, %s59
    %p63 = pneg %p57
    %p64 = scmp.eq.s32.totalorder %s8, 1
    %p65 = por %p63, %p64
    %p66 = scmp.ne.s32.totalorder %s58, %s61
    %p67 = scmp.eq.s32.totalorder %s8, 0
    %p68 = por %p66, %p67
    %p69 = scmp.ne.s32.totalorder %s58, %s61
    %p70 = scmp.eq.s32.totalorder %s13, 1
    %p71 = por %p69, %p70
    %p72 = scmp.ne.s32.totalorder %s61, %s62
    %p73 = scmp.eq.s32.totalorder %s13, 0
    %p74 = por %p72, %p73
    %p75 = scmp.ne.s32.totalorder %s61, %s62
    %p76 = scmp.eq.s32.totalorder %s14, 1
    %p77 = por %p75, %p76
    %p79 = scmp.ne.s32.totalorder %s62, %s78
    %p80 = scmp.eq.s32.totalorder %s14, 0
    %p81 = por %p79, %p80
    %s82 = ssub.s32 %s16, %s23
    %s83 = ssub.s32 %s15, %s27
    %s84 = sor.u32 %s82, %s83
    %p85 = scmp.eq.s32.totalorder %s84, 0
    %s87 = sadd.s32 %s86, 1
    %s88 = scalar_select %p85, %s86, %s87
    %p91 = pneg %p85
    %p92 = scmp.eq.s32.totalorder %s8, 1
    %p93 = por %p91, %p92
    %p94 = scmp.ne.s32.totalorder %s86, %s89
    %p95 = scmp.eq.s32.totalorder %s8, 0
    %p96 = por %p94, %p95
    %p97 = scmp.ne.s32.totalorder %s86, %s89
    %p98 = scmp.eq.s32.totalorder %s13, 1
    %p99 = por %p97, %p98
    %p100 = scmp.ne.s32.totalorder %s89, %s90
    %p101 = scmp.eq.s32.totalorder %s13, 0
    %p102 = por %p100, %p101
    %p103 = scmp.ne.s32.totalorder %s89, %s90
    %p104 = scmp.eq.s32.totalorder %s14, 1
    %p105 = por %p103, %p104
    %p107 = scmp.ne.s32.totalorder %s90, %s106
    %p108 = scmp.eq.s32.totalorder %s14, 0
    %p109 = por %p107, %p108
    %p110 = scmp.le.s32.totalorder 1, %s8
    %p111 = scmp.lt.s32.totalorder %s8, 3
    %p112 = pnand %p110, %p111
    %p113 = pneg %p112
    // Predicated region
    $region9: #{tpu_custom_call.1} parent=5 // pred_check
      _
    $region10: #{tpu_custom_call.1} parent=5 // pred_check_branch
      %115 = sbr.rel (%p112) target = $region12
    $region11: #{tpu_custom_call.1} parent=5 // pred_region
      %s116 = ssub.s32 %s8, 1
      // Predicated region
      $region13: #{tpu_custom_call.1} parent=11 // pred_check
        %p117 = pneg %p74
      $region14: #{tpu_custom_call.1} parent=11 // pred_check_branch
        %119 = sbr.rel (%p117) target = $region16
      $region15: #{tpu_custom_call.1} parent=11 // pred_region
        %s120 = smul.u32 4, %s17
        %p121 = scmp.lt.s32.totalorder %s120, 3
        %s122 = scalar_select %p121, %s120, 3
        %s123 = smul.addr %s122, 8
        %s124 = scalar_lea.vmem %s1, %s123
        %s125 = smul.u32 4, %s17
      $region16: #{tpu_custom_call.1} parent=11 // pred_fallthru
        _
    $region12: #{tpu_custom_call.1} parent=5 // pred_fallthru
      _
    %p126 = scmp.lt.s32.totalorder %s8, 2
    // Predicated region
    $region17: #{tpu_custom_call.1} parent=5 // pred_check
      %p127 = pneg %p126
    $region18: #{tpu_custom_call.1} parent=5 // pred_check_branch
      %129 = sbr.rel (%p127) target = $region20
    $region19: #{tpu_custom_call.1} parent=5 // pred_region
      // Predicated region
      $region21: #{tpu_custom_call.1} parent=19 // pred_check
        %p130 = pneg %p42
      $region22: #{tpu_custom_call.1} parent=19 // pred_check_branch
        %132 = sbr.rel (%p130) target = $region24
      $region23: #{tpu_custom_call.1} parent=19 // pred_region
        %s133 = smul.u32 4, %s15
        %p134 = scmp.lt.s32.totalorder %s16, 1
        %s135 = scalar_select %p134, %s16, 1
        %p136 = scmp.lt.s32.totalorder %s133, 3
        %s137 = scalar_select %p136, %s133, 3
        %s138 = smul.addr %s135, 4
        %s139 = sadd.s32 %s137, %s138
        %s140 = smul.addr %s139, 8
        %s141 = scalar_lea.vmem %s0, %s140
        %s142 = smul.u32 4, %s15
      $region24: #{tpu_custom_call.1} parent=19 // pred_fallthru
        _
    $region20: #{tpu_custom_call.1} parent=5 // pred_fallthru
      _
    %p143 = scmp.le.s32.totalorder 1, %s8
    %p144 = scmp.lt.s32.totalorder %s8, 3
    %p145 = pnand %p143, %p144
    %p146 = pneg %p145
    // Predicated region
    $region25: #{tpu_custom_call.1} parent=5 // pred_check
      _
    $region26: #{tpu_custom_call.1} parent=5 // pred_check_branch
      %148 = sbr.rel (%p145) target = $region28
    $region27: #{tpu_custom_call.1} parent=5 // pred_region
      %s149 = ssub.s32 %s8, 1
      %s150 = smul.u32 4, %s17
      %p151 = scmp.lt.s32.totalorder %s18, 1
      %s152 = scalar_select %p151, %s18, 1
      %p153 = scmp.lt.s32.totalorder %s150, 3
      %s154 = scalar_select %p153, %s150, 3
      %s155 = smul.addr %s152, 4
      %s156 = sadd.s32 %s154, %s155
      %s157 = smul.addr %s156, 8
      %s158 = scalar_lea.vmem %s0, %s157
      %p159 = pneg %p48
      %p160 = pneg %p45
      %s161 = smul.u32 4, %s17
      %p162 = scmp.lt.s32.totalorder %s161, 3
      %s163 = scalar_select %p162, %s161, 3
      %s164 = smul.addr %s163, 8
      %s165 = scalar_lea.vmem %s1, %s164
      %p166 = pneg %p74
      %p167 = pneg %p71
      %p168 = pneg %p102
      %p169 = pneg %p99
      %s170 = smul.u32 4, %s17
      %p171 = scmp.lt.s32.totalorder %s18, 1
      %s172 = scalar_select %p171, %s18, 1
      %p173 = scmp.lt.s32.totalorder %s170, 3
      %s174 = scalar_select %p173, %s170, 3
      %s175 = smul.addr %s172, 4
      %s176 = sadd.s32 %s174, %s175
      %s177 = smul.addr %s176, 8
      %s178 = scalar_lea.vmem %s2, %s177
      %s179 = smul.u32 4, %s17
      %p180 = scmp.lt.s32.totalorder %s18, 1
      %s181 = scalar_select %p180, %s18, 1
      %p182 = scmp.lt.s32.totalorder %s179, 3
      %s183 = scalar_select %p182, %s179, 3
      %s184 = smul.addr %s181, 4
      %s185 = sadd.s32 %s183, %s184
      %s186 = smul.addr %s185, 8
      %s187 = scalar_lea.vmem %s0, %s186
      %s188 = smul.u32 4, %s17
      %s189 = smul.u32 4, %s17
      %p190 = scmp.lt.s32.totalorder %s189, 3
      %s191 = scalar_select %p190, %s189, 3
      %s192 = smul.addr %s191, 8
      %s193 = scalar_lea.vmem %s1, %s192
      %s194 = smul.u32 4, %s17
      %s195 = smul.u32 4, %s17
      %p196 = scmp.lt.s32.totalorder %s18, 1
      %s197 = scalar_select %p196, %s18, 1
      %p198 = scmp.lt.s32.totalorder %s195, 3
      %s199 = scalar_select %p198, %s195, 3
      %s200 = smul.addr %s197, 4
      %s201 = sadd.s32 %s199, %s200
      %s202 = smul.addr %s201, 8
      %s203 = scalar_lea.vmem %s2, %s202
      %s204 = smul.u32 4, %s17
      %v205 = vld [vmem:[%s187] sm:$0xff]
      %v206 = vld [vmem:[%s187 + $0x8] sm:$0xff]
      %v207 = vld [vmem:[%s187 + $0x10] sm:$0xff]
      %v208 = vld [vmem:[%s187 + $0x18] sm:$0x3f]
      %v209 = vld [vmem:[%s193] sm:$0xff]
      %v210 = vld [vmem:[%s193 + $0x8] sm:$0xff]
      %v211 = vld [vmem:[%s193 + $0x10] sm:$0xff]
      %v212 = vld [vmem:[%s193 + $0x18] sm:$0x3f]
      %v213 = vadd.f32 %v205, %v209
      %v214 = vadd.f32 %v206, %v210
      %v215 = vadd.f32 %v207, %v211
      %v216 = vadd.f32 %v208, %v212
      %217 = vst [vmem:[%s203] sm:$0xff] %v213
      %218 = vst [vmem:[%s203 + $0x8] sm:$0xff] %v214
      %219 = vst [vmem:[%s203 + $0x10] sm:$0xff] %v215
      %220 = vst [vmem:[%s203 + $0x18] sm:$0x3f] %v216
      %s221 = smul.u32 4, %s17
      %p222 = scmp.lt.s32.totalorder %s18, 1
      %s223 = scalar_select %p222, %s18, 1
      %p224 = scmp.lt.s32.totalorder %s221, 3
      %s225 = scalar_select %p224, %s221, 3
      %s226 = smul.addr %s223, 4
      %s227 = sadd.s32 %s225, %s226
      %s228 = smul.addr %s227, 8
      %s229 = scalar_lea.vmem %s2, %s228
      // Predicated region
      $region29: #{tpu_custom_call.1} parent=27 // pred_check
        %p230 = pneg %p99
      $region30: #{tpu_custom_call.1} parent=27 // pred_check_branch
        %232 = sbr.rel (%p230) target = $region32
      $region31: #{tpu_custom_call.1} parent=27 // pred_region
        %s233 = smul.u32 4, %s17
      $region32: #{tpu_custom_call.1} parent=27 // pred_fallthru
        _
    $region28: #{tpu_custom_call.1} parent=5 // pred_fallthru
      _
    %p234 = scmp.le.s32.totalorder 2, %s8
    // Predicated region
    $region33: #{tpu_custom_call.1} parent=5 // pred_check
      %p235 = pneg %p234
    $region34: #{tpu_custom_call.1} parent=5 // pred_check_branch
      %237 = sbr.rel (%p235) target = $region36
    $region35: #{tpu_custom_call.1} parent=5 // pred_region
      %s238 = ssub.s32 %s8, 2
      // Predicated region
      $region37: #{tpu_custom_call.1} parent=35 // pred_check
        %p239 = pneg %p105
      $region38: #{tpu_custom_call.1} parent=35 // pred_check_branch
        %241 = sbr.rel (%p239) target = $region40
      $region39: #{tpu_custom_call.1} parent=35 // pred_region
        %s242 = smul.u32 4, %s19
        %p243 = scmp.lt.s32.totalorder %s20, 1
        %s244 = scalar_select %p243, %s20, 1
        %p245 = scmp.lt.s32.totalorder %s242, 3
        %s246 = scalar_select %p245, %s242, 3
        %s247 = smul.addr %s244, 4
        %s248 = sadd.s32 %s246, %s247
        %s249 = smul.addr %s248, 8
        %s250 = scalar_lea.vmem %s2, %s249
      $region40: #{tpu_custom_call.1} parent=35 // pred_fallthru
        _
    $region36: #{tpu_custom_call.1} parent=5 // pred_fallthru
      _
  $region6: #{tpu_custom_call.1} parent=0 // loop_footer
    %s12 = sadd.s32 1, %s8
  $region7: #{tpu_custom_call.1} parent=0 // loop_footer_branch
    %7 = sbr.rel target = $region3
  $region8: #{tpu_custom_call.1} parent=0 // loop_exit
    _

</llo_original>
